<compile_context>
chip_gen: v5e
topology: v5e:2x2
jax: 0.10.0
libtpu: 0.0.40
codegen_flags: <defaults>
</compile_context>

<pallas_src>
import functools

import jax
import jax.numpy as jnp
from jax.experimental import pallas as pl
from jax.experimental.pallas import tpu as pltpu


_LANE = 128  # hardware lane width


def _round_up(a, b):
    return ((a + b - 1) // b) * b


def _round_down(a, b):
    return (a // b) * b


def _device_kind():
    try:
        return jax.devices()[0].device_kind.lower()
    except Exception:
        return ""


def _lambda_kernel(x_ref, o_ref, *, f, compute_dtype):
    x = x_ref[...]
    if compute_dtype is not None and x.dtype != compute_dtype:
        # One up-cast per tile (only enabled on v5e, which lacks bf16 VPU/EUP).
        x = x.astype(compute_dtype)
    # User-supplied elementwise f runs on the whole VMEM tile (VPU/EUP path).
    o_ref[...] = f(x).astype(o_ref.dtype)


class PallasLambda:
    """Pallas equivalent of zenkai.Lambda.

    Single-tensor, shape-preserving, elementwise f is lowered to a Pallas
    kernel; anything else is executed as plain JAX with identical semantics.
    """

    def __init__(self, f, *, block_lanes=1024, min_pallas_bytes=256 * 1024,
                 compute_16bit_in_f32=None, assume_elementwise=True,
                 tile_bytes=None, vmem_limit_bytes=None):
        self._f = f
        self._block_lanes = block_lanes
        self._min_pallas_bytes = min_pallas_bytes
        # None -> auto: upcast 16-bit inputs to f32 only on v5e.
        self._compute_16bit_in_f32 = compute_16bit_in_f32
        self._assume_elementwise = assume_elementwise
        self._tile_bytes = tile_bytes            # None -> auto per chip gen
        self._vmem_limit_bytes = vmem_limit_bytes  # None -> auto per chip gen

    # ------------------------------------------------------------------ #
    def __call__(self, *xs):
        # Lambda accepts arbitrary functions; only the single-tensor,
        # shape-preserving elementwise case is lowered to Pallas.
        if len(xs) != 1 or not self._assume_elementwise:
            # TODO(synk): multi-input elementwise lambdas still run as plain JAX.
            return self._f(*xs)
        x = xs[0]
        if not (hasattr(x, "shape") and hasattr(x, "dtype") and hasattr(x, "reshape")):
            return self._f(x)

        in_dtype = jnp.dtype(x.dtype)
        try:
            out_aval = jax.eval_shape(self._f, jax.ShapeDtypeStruct(x.shape, in_dtype))
        except Exception:
            return self._f(x)
        if (not isinstance(out_aval, jax.ShapeDtypeStruct)
                or tuple(out_aval.shape) != tuple(x.shape)):
            # Non-shape-preserving f (reduction, reshape, ...) cannot be tiled
            # block-by-block; fall back to plain JAX (still correct).
            return self._f(x)
        out_dtype = jnp.dtype(out_aval.dtype)

        total = int(x.size)
        if total == 0 or total * in_dtype.itemsize < self._min_pallas_bytes:
            # Tiny tensors: pallas_call launch/grid overhead dwarfs the HBM
            # traffic; XLA fuses the elementwise op anyway.
            return self._f(x)

        # ---- split off the non-128-divisible tail (< 128 elems, plain JAX) ----
        head = _round_down(total, _LANE)
        if head == 0:
            return self._f(x)
        tail = total - head

        xf = x.reshape(-1)  # metadata-only
        y_head = self._run_pallas(xf[:head] if tail else xf, head, in_dtype, out_dtype)
        if tail:
            y_tail = self._f(xf[head:]).astype(out_dtype)
            yf = jnp.concatenate([y_head, y_tail])
        else:
            yf = y_head  # fully copy-free path (common case)
        return yf.reshape(x.shape)

    # ------------------------------------------------------------------ #
    def _run_pallas(self, xflat, n, in_dtype, out_dtype):
        """Run f on a flat array of n elements, n % 128 == 0."""
        kind = _device_kind()
        is_v7 = ("7x" in kind) or ("v7" in kind)
        is_v5e = ("v5 lite" in kind) or ("v5e" in kind) or ("v5litepod" in kind)

        # f32 compute only where the VPU/EUP lack a native 16-bit path (v5e).
        upcast_16bit = is_v5e if self._compute_16bit_in_f32 is None \
            else self._compute_16bit_in_f32
        compute_dtype = None
        if upcast_16bit and in_dtype in (jnp.dtype(jnp.bfloat16),
                                         jnp.dtype(jnp.float16)):
            compute_dtype = jnp.float32

        # ---- lane-dense 2D slab: (m, tk), tk | n, tk % 128 == 0 (zero-copy) ----
        lane_cap = max(_LANE, _round_down(min(self._block_lanes, n), _LANE))
        tk = _LANE
        for cand in range(lane_cap, _LANE - 1, -_LANE):
            if n % cand == 0:
                tk = cand
                break
        m = n // tk

        # ---- tile rows from a per-buffer byte budget (not a grid-iter floor) ----
        elem_bytes = max(in_dtype.itemsize, out_dtype.itemsize,
                         4 if compute_dtype is not None else in_dtype.itemsize)
        sublane = max(8, 32 // min(in_dtype.itemsize, out_dtype.itemsize))
        budget = self._tile_bytes if self._tile_bytes is not None \
            else ((2 << 20) if is_v7 else (4 << 20))
        vmem_limit = self._vmem_limit_bytes if self._vmem_limit_bytes is not None \
            else ((32 << 20) if is_v7 else (64 << 20))

        if m <= sublane:
            tm = m  # block row dim == full array row dim (always allowed)
        else:
            tm = max(sublane, _round_down(budget // (tk * elem_bytes), sublane))
            tm = min(tm, _round_down(m, sublane))
            # v7x has 2 TensorCores: split a single-tile grid in two when each
            # half still keeps >= ~1 MiB per tile.
            if is_v7 and pl.cdiv(m, tm) == 1:
                half = max(sublane, _round_up(pl.cdiv(m, 2), sublane))
                if half * tk * elem_bytes >= (1 << 20):
                    tm = min(tm, half)

        x2d = xflat.reshape(m, tk)  # metadata-only

        # Trace-time sanity check: f on a (tm, tk) tile must preserve its shape.
        tile_dtype = compute_dtype if compute_dtype is not None else in_dtype
        try:
            tile_out = jax.eval_shape(self._f, jax.ShapeDtypeStruct((tm, tk), tile_dtype))
        except Exception:
            tile_out = None
        if tile_out is None or tuple(tile_out.shape) != (tm, tk):
            return self._f(xflat).astype(out_dtype)

        kernel = functools.partial(_lambda_kernel, f=self._f,
                                   compute_dtype=compute_dtype)
        out2d = pl.pallas_call(
            kernel,
            out_shape=jax.ShapeDtypeStruct((m, tk), out_dtype),
            grid_spec=pltpu.PrefetchScalarGridSpec(
                num_scalar_prefetch=0,
                grid=(pl.cdiv(m, tm),),   # ragged last block masked by Pallas
                in_specs=[pl.BlockSpec((tm, tk), lambda i: (i, 0))],
                out_specs=pl.BlockSpec((tm, tk), lambda i: (i, 0)),
            ),
            compiler_params=pltpu.CompilerParams(
                dimension_semantics=("parallel",),
                vmem_limit_bytes=vmem_limit,
            ),
        )(x2d)
        return out2d.reshape(-1)  # metadata-only


if __name__ == "__main__":
    key = jax.random.PRNGKey(0)

    # Concrete f for the demo: SiLU, i.e. Lambda(lambda t: t * torch.sigmoid(t)).
    f = lambda t: t * jax.nn.sigmoid(t)

    lam = PallasLambda(f)
    lam_forced = PallasLambda(f, min_pallas_bytes=0)

    # 1) Small NCHW input (2,4,16,16) = 2048 elems, forced through Pallas:
    #    128-divisible -> copy-free (2, 1024) slab, single tile, grid=(1,).
    x_small = jax.random.normal(key, (2, 4, 16, 16), dtype=jnp.float32)
    y_small = jax.block_until_ready(lam_forced(x_small))
    assert y_small.shape == x_small.shape and y_small.dtype == x_small.dtype
    assert jnp.allclose(y_small, f(x_small), atol=1e-5, rtol=1e-5)

    #    Same input under the default size threshold: plain-JAX path (by design).
    y_plain = jax.block_until_ready(lam(x_small))
    assert jnp.allclose(y_plain, f(x_small), atol=1e-5, rtol=1e-5)

    # 2) 512 KiB f32 input: Pallas path under the default threshold,
    #    copy-free (128, 1024) slab, one 512-KiB tile.
    x_med = jax.random.normal(jax.random.fold_in(key, 1), (4, 8, 32, 128),
                              dtype=jnp.float32)
    y_med = jax.block_until_ready(lam(x_med))
    assert y_med.shape == x_med.shape and y_med.dtype == x_med.dtype
    assert jnp.allclose(y_med, f(x_med), atol=1e-5, rtol=1e-5)

    # 3) bf16 input: compute dtype auto-selected per chip generation
    #    (f32 upcast on v5e only; native bf16 on v6e/v7x).
    x_bf16 = jax.random.normal(jax.random.fold_in(key, 2), (2, 4, 16, 32),
                               dtype=jnp.bfloat16)
    y_bf16 = jax.block_until_ready(lam_forced(x_bf16))
    assert y_bf16.shape == x_bf16.shape and y_bf16.dtype == x_bf16.dtype
    assert jnp.allclose(y_bf16.astype(jnp.float32),
                        f(x_bf16.astype(jnp.float32)), atol=2e-2, rtol=2e-2)

    # 4) Element count not a multiple of 128 (3*5*7*11 = 1155): Pallas on the
    #    1152-element prefix, plain-JAX epilogue on the 3-element tail.
    x_odd = jax.random.normal(jax.random.fold_in(key, 3), (3, 5, 7, 11),
                              dtype=jnp.float32)
    y_odd = jax.block_until_ready(lam_forced(x_odd))
    assert y_odd.shape == x_odd.shape and y_odd.dtype == x_odd.dtype
    assert jnp.allclose(y_odd, f(x_odd), atol=1e-5, rtol=1e-5)

    print("KERNEL_OK")
</pallas_src>

<mosaic_0001>
module attributes {stable_mosaic.version = 11 : i64} {
  func.func @_lambda_kernel(%arg0: i32, %arg1: memref<2x1024xf32, #tpu.memory_space<vmem>>, %arg2: memref<2x1024xf32, #tpu.memory_space<vmem>>) attributes {dimension_semantics = [#tpu.dimension_semantics<parallel>], iteration_bounds = array<i64: 1>, scalar_prefetch = 0 : i64, scratch_operands = 0 : i64, tpu.core_type = #tpu.core_type<tc>, window_params = [{transform_indices = @transform_0, window_bounds = array<i64: 2, 1024>}, {transform_indices = @transform_1, window_bounds = array<i64: 2, 1024>}]} {
    %c0 = arith.constant 0 : index
    %c0_0 = arith.constant 0 : index
    %0 = vector.load %arg1[%c0, %c0_0] : memref<2x1024xf32, #tpu.memory_space<vmem>>, vector<2x1024xf32>
    %1 = arith.negf %0 : vector<2x1024xf32>
    %2 = math.exp %1 : vector<2x1024xf32>
    %cst = arith.constant 1.000000e+00 : f32
    %3 = vector.broadcast %cst : f32 to vector<2x1024xf32>
    %4 = arith.addf %3, %2 : vector<2x1024xf32>
    %5 = arith.divf %3, %4 : vector<2x1024xf32>
    %6 = arith.mulf %0, %5 : vector<2x1024xf32>
    %c0_1 = arith.constant 0 : index
    %c0_2 = arith.constant 0 : index
    %7 = vector.load %arg2[%c0_1, %c0_2] : memref<2x1024xf32, #tpu.memory_space<vmem>>, vector<2x1024xf32>
    tpu.vector_store %arg2[%c0_1, %c0_2], %6 {strides = array<i32>} : memref<2x1024xf32, #tpu.memory_space<vmem>>, vector<2x1024xf32>,
    return
  }
  func.func @transform_0(%arg0: i32) -> (i32, i32) {
    %c0_i32 = arith.constant 0 : i32
    %c0_i32_0 = arith.constant 0 : i32
    return %arg0, %c0_i32 : i32, i32
  }
  func.func @transform_1(%arg0: i32) -> (i32, i32) {
    %c0_i32 = arith.constant 0 : i32
    %c0_i32_0 = arith.constant 0 : i32
    return %arg0, %c0_i32 : i32, i32
  }
}

</mosaic_0001>

<llo_original>
// kernel: tpu_custom_call.1
$region0: #{tpu_custom_call.1}
  #allocation0 [shape = 'u32[]', space=smem, size = 0x4, offset = 0x4, fixed_abs, tag = 'smem constant byte address 0x4 - core index']
  #allocation1 [shape = 'u32[72,128]{1,0:T(1,128)}', space=vmem, size = 0x9000, scoped, tag = 'internal scratch']
  %s0 = inlined_call_operand.hbm [shape: f32[2,1024], index: 0, kind: input, shape index: {}]
  %s1 = inlined_call_operand.hbm [shape: f32[2,1024], index: 1, kind: output, shape index: {}]
  %s2 = sld [smem:[#allocation0]]
  $region18: #{tpu_custom_call.1} parent=0
    _
  %s4 = ssub.s32 1, %s2
  %s5 = scalar_select 0, %s4, %s2
  $region1: #{tpu_custom_call.1} parent=0
    #allocation2 [shape = 'u8[8192]{0}', space=vmem, size = 0x2000, scoped, tag = 'input window, operand 0, single buffered']
    #allocation3 [shape = 's32[1]{0}', space=sflag, size = 0x4, scoped, tag = 'scoped memory for tpu_custom_call.1']
    #allocation4 [shape = 's32[1]{0}', space=sflag, size = 0x4, scoped, tag = 'scoped memory for tpu_custom_call.1']
    #allocation5 [shape = 'u8[8192]{0}', space=vmem, size = 0x2000, scoped, tag = 'output window, operand 0, single buffered']
    %6 = vsyncpa [#allocation3], 0
    %7 = vsyncpa [#allocation4], 0
    // Predicated region
    $region2: #{tpu_custom_call.1} parent=1 // pred_check
      _
    $region3: #{tpu_custom_call.1} parent=1 // pred_check_branch
      %9 = sbr.rel (0) target = $region5
    $region4: #{tpu_custom_call.1} parent=1 // pred_region
      %11 = vsyncadd [#allocation3], 0
      %s13 = sshll.u32 %s0, 4
      %s14 = int_to_ptr.hbm [resolvable:$true] %s13
      %s15 = sshll.u32 [#allocation2], 4
      %s16 = int_to_ptr.vmem [resolvable:$true] %s15
      %18 = dma.hbm_to_vmem [thread:$0]  %s14, 256, %s16, [#allocation3]
    $region5: #{tpu_custom_call.1} parent=1 // pred_fallthru
      _
    // Predicated region
    $region6: #{tpu_custom_call.1} parent=1 // pred_check
      _
    $region7: #{tpu_custom_call.1} parent=1 // pred_check_branch
      %20 = sbr.rel (0) target = $region9
    $region8: #{tpu_custom_call.1} parent=1 // pred_region
      %22 = dma.done [#allocation3], 256
    $region9: #{tpu_custom_call.1} parent=1 // pred_fallthru
      _
    %v23 = vld [vmem:[#allocation2] sm:$0xff]
    %v24 = vld [vmem:[#allocation2 + $0x8] sm:$0xff]
    %v25 = vxor.u32 %v23, 2147483648
    %v26 = vxor.u32 %v24, 2147483648
    %v27 = vmul.f32 %v25, 1.442695
    %v28 = vpow.pop %v27
    %v29 = vmul.f32 %v26, 1.442695
    %v30 = vpow.pop %v29
    %v31 = vadd.f32 %v28, 1.0
    %v32 = vadd.f32 %v30, 1.0
    %v33 = vrcp.pop %v31
    %v34 = vmul.f32 %v31, %v33
    %v35 = vsub.f32 1.0, %v34
    %v36 = vmul.f32 %v33, %v35
    %v37 = vadd.f32 %v33, %v36
    %vm38 = vweird.f32 %v31
    %vm39 = vweird.f32 %v33
    %vm40 = vmor %vm38, %vm39
    %v41 = vsel %vm40, %v33, %v37
    %v42 = vand.u32 2147483647, %v31
    %vm43 = vcmp.eq.f32.partialorder %v42, 8.507059e+37
    %v44 = vand.u32 %v31, 2147483648
    %v45 = vor.u32 1.1754944e-38, %v44
    %v46 = vsel %vm43, %v45, %v41
    %v47 = vmul.f32 1.0, %v46
    %v48 = vrcp.pop %v32
    %v49 = vmul.f32 %v32, %v48
    %v50 = vsub.f32 1.0, %v49
    %v51 = vmul.f32 %v48, %v50
    %v52 = vadd.f32 %v48, %v51
    %vm53 = vweird.f32 %v32
    %vm54 = vweird.f32 %v48
    %vm55 = vmor %vm53, %vm54
    %v56 = vsel %vm55, %v48, %v52
    %v57 = vand.u32 2147483647, %v32
    %vm58 = vcmp.eq.f32.partialorder %v57, 8.507059e+37
    %v59 = vand.u32 %v32, 2147483648
    %v60 = vor.u32 1.1754944e-38, %v59
    %v61 = vsel %vm58, %v60, %v56
    %v62 = vmul.f32 1.0, %v61
    %v63 = vmul.f32 %v23, %v47
    %v64 = vmul.f32 %v24, %v62
    %65 = vst [vmem:[#allocation5] sm:$0xff] %v63
    %66 = vst [vmem:[#allocation5 + $0x8] sm:$0xff] %v64
    // Predicated region
    $region10: #{tpu_custom_call.1} parent=1 // pred_check
      _
    $region11: #{tpu_custom_call.1} parent=1 // pred_check_branch
      %68 = sbr.rel (0) target = $region13
    $region12: #{tpu_custom_call.1} parent=1 // pred_region
      %70 = vsyncadd [#allocation4], 0
      %s72 = sshll.u32 [#allocation5], 4
      %s73 = int_to_ptr.vmem [resolvable:$true] %s72
      %s74 = sshll.u32 %s1, 4
      %s75 = int_to_ptr.hbm [resolvable:$true] %s74
      %77 = dma.vmem_to_hbm [thread:$0]  %s73, 256, %s75, [#allocation4]
    $region13: #{tpu_custom_call.1} parent=1 // pred_fallthru
      _
    // Predicated region
    $region14: #{tpu_custom_call.1} parent=1 // pred_check
      _
    $region15: #{tpu_custom_call.1} parent=1 // pred_check_branch
      %79 = sbr.rel (0) target = $region17
    $region16: #{tpu_custom_call.1} parent=1 // pred_region
      %81 = dma.done [#allocation4], 256
    $region17: #{tpu_custom_call.1} parent=1 // pred_fallthru
      _
    %82 = vsyncpa [#allocation3], 1
    %83 = vsyncpa [#allocation4], 1

</llo_original>
